<compile_context>
chip_gen: v7x
topology: tpu7x:2x2x1
jax: 0.10.0
libtpu: 0.0.40
codegen_flags: <defaults>
</compile_context>

<pallas_src>
import jax
import jax.numpy as jnp
from jax.experimental import pallas as pl
from jax.experimental.pallas import tpu as pltpu

LANES = 128  # one f32 vreg row per slab row -> full-width, unmasked vst


def _linear_1x1_kernel(w_ref, b_ref, x_ref, o_ref):
    # w_ref (1, 1) and b_ref (1,) live in SMEM; x_ref / o_ref are lane-dense
    # VMEM tiles of shape (tile_rows, 128).
    w = w_ref[0, 0]
    b = b_ref[0]
    # y = x @ W^T + b  ==  x * w + b  for a 1x1 weight (single fused FMA path).
    o_ref[...] = x_ref[...] * w + b


def _vmem_budget():
    """Return (max_tile_rows, vmem_limit_bytes).

    Conservative defaults that are safe on v7x (64 MiB physical VMEM); on the
    128-MiB-VMEM parts (v5e/v6e) allow a 2x bigger streaming tile for slightly
    fewer grid steps.  Any failure to query the chip falls back to the safe
    setting.
    """
    max_tile_bytes = 4 << 20          # 4 MiB/buffer; in+out double-buffered = 16 MiB
    vmem_limit = 32 << 20
    try:
        info = pltpu.get_tpu_info()
        if getattr(info, "vmem_capacity_bytes", 0) >= (128 << 20):
            max_tile_bytes = 8 << 20  # v5e / v6e: 32 MiB of 64 MiB scoped
            vmem_limit = 64 << 20
    except Exception:
        pass
    return max_tile_bytes // (LANES * 4), vmem_limit


def _choose_tile_rows(rows, max_tile_rows):
    """Pick tile_rows for a (rows, 128) f32 slab.

    * rows <= 256 (slab <= 128 KiB): one block / one grid step -- the 0.35 us
      per-step pipeline overhead would exceed the saved DMA time.
    * otherwise: at least 2 tiles (so v7x's second TensorCore is not idle),
      rounded up to a multiple of 8 sublanes, capped at the streaming tile.
      Partial last blocks are handled by Pallas, so rows need not divide evenly.
    """
    if rows <= 256:
        return rows                    # may be non-multiple-of-8: equals full dim
    half = -(-rows // 2)
    half = -(-half // 8) * 8           # round up to a multiple of 8 sublanes
    return min(half, max_tile_rows)


def linear_regression_forward(x, weight, bias):
    """Pallas equivalent of LinearRegressionModel.forward.

    Args:
      x:      (N, 1) float32
      weight: (1, 1) float32   (nn.Linear weight, [out_features, in_features])
      bias:   (1,)   float32
    Returns:
      (N, 1) float32
    """
    n = x.shape[0]
    dtype = x.dtype

    rows = -(-n // LANES)              # static ceil-div
    padded = rows * LANES

    max_tile_rows, vmem_limit = _vmem_budget()
    tile_rows = _choose_tile_rows(rows, max_tile_rows)
    num_tiles = -(-rows // tile_rows)

    # Lane-dense slab.  Aligned case (n % 128 == 0): contiguous reshape only,
    # zero wrapper copies.  Ragged case: pad only the <128-element remainder.
    x_flat = x.reshape(-1)
    if padded != n:
        x_flat = jnp.pad(x_flat, (0, padded - n))
    x_slab = x_flat.reshape(rows, LANES)

    y_slab = pl.pallas_call(
        _linear_1x1_kernel,
        out_shape=jax.ShapeDtypeStruct((rows, LANES), dtype),
        grid=(num_tiles,),
        in_specs=[
            pl.BlockSpec(memory_space=pltpu.SMEM),                 # weight (1, 1)
            pl.BlockSpec(memory_space=pltpu.SMEM),                 # bias   (1,)
            pl.BlockSpec((tile_rows, LANES), lambda i: (i, 0)),    # x row-tiles
        ],
        out_specs=pl.BlockSpec((tile_rows, LANES), lambda i: (i, 0)),
        compiler_params=pltpu.CompilerParams(
            dimension_semantics=("parallel",),   # independent rows -> megacore split
            vmem_limit_bytes=vmem_limit,
        ),
    )(weight, bias, x_slab)

    if padded == n:
        return y_slab.reshape(n, 1)              # free contiguous reshape
    # Ragged tail: drop the (< 128) padded outputs (they just hold the bias).
    return y_slab.reshape(-1)[:n].reshape(n, 1)


if __name__ == "__main__":
    key = jax.random.PRNGKey(0)
    k_w, k_b, k_x1, k_x2, k_x3 = jax.random.split(key, 5)

    # Parameter init mirroring nn.Linear(1, 1) defaults:
    # U(-1/sqrt(in_features), 1/sqrt(in_features)) with in_features = 1.
    weight = jax.random.uniform(k_w, (1, 1), jnp.float32, minval=-1.0, maxval=1.0)
    bias = jax.random.uniform(k_b, (1,), jnp.float32, minval=-1.0, maxval=1.0)

    cases = (
        ("tiny", 8, k_x1),         # single (1, 128) block, single grid step
        ("aligned", 65_536, k_x2), # n % 128 == 0 -> zero-copy wrapper, 2-tile grid
        ("ragged", 70_001, k_x3),  # <128-element tail pad, partial last block
    )
    for name, n, k in cases:
        x = jax.random.normal(k, (n, 1), jnp.float32)
        y = jax.block_until_ready(linear_regression_forward(x, weight, bias))
        y_ref = x @ weight.T + bias
        assert y.shape == (n, 1), name
        assert jnp.allclose(y, y_ref, atol=1e-6, rtol=1e-6), name

    print("KERNEL_OK")
</pallas_src>

<mosaic_0001>
module attributes {stable_mosaic.version = 11 : i64} {
  func.func @_linear_1x1_kernel(%arg0: i32, %arg1: memref<1x1xf32, #tpu.memory_space<smem>>, %arg2: memref<1xf32, #tpu.memory_space<smem>>, %arg3: memref<1x128xf32, #tpu.memory_space<vmem>>, %arg4: memref<1x128xf32, #tpu.memory_space<vmem>>) attributes {dimension_semantics = [#tpu.dimension_semantics<parallel>], iteration_bounds = array<i64: 1>, scalar_prefetch = 0 : i64, scratch_operands = 0 : i64, tpu.core_type = #tpu.core_type<tc>, window_params = [{transform_indices = @transform_0, window_bounds = array<i64: 1, 1>}, {transform_indices = @transform_1, window_bounds = array<i64: 1>}, {transform_indices = @transform_2, window_bounds = array<i64: 1, 128>}, {transform_indices = @transform_3, window_bounds = array<i64: 1, 128>}]} {
    %c0 = arith.constant 0 : index
    %c0_0 = arith.constant 0 : index
    %0 = memref.load %arg1[%c0, %c0_0] : memref<1x1xf32, #tpu.memory_space<smem>>
    %c0_1 = arith.constant 0 : index
    %1 = memref.load %arg2[%c0_1] : memref<1xf32, #tpu.memory_space<smem>>
    %c0_2 = arith.constant 0 : index
    %c0_3 = arith.constant 0 : index
    %2 = vector.load %arg3[%c0_2, %c0_3] : memref<1x128xf32, #tpu.memory_space<vmem>>, vector<1x128xf32>
    %3 = vector.broadcast %0 : f32 to vector<1x128xf32>
    %4 = arith.mulf %2, %3 : vector<1x128xf32>
    %5 = vector.broadcast %1 : f32 to vector<1x128xf32>
    %6 = arith.addf %4, %5 : vector<1x128xf32>
    %c0_4 = arith.constant 0 : index
    %c0_5 = arith.constant 0 : index
    %7 = vector.load %arg4[%c0_4, %c0_5] : memref<1x128xf32, #tpu.memory_space<vmem>>, vector<1x128xf32>
    tpu.vector_store %arg4[%c0_4, %c0_5], %6 {strides = array<i32>} : memref<1x128xf32, #tpu.memory_space<vmem>>, vector<1x128xf32>,
    return
  }
  func.func @transform_0(%arg0: i32) -> (i32, i32) {
    %c0_i32 = arith.constant 0 : i32
    %c0_i32_0 = arith.constant 0 : i32
    %c0_i32_1 = arith.constant 0 : i32
    return %c0_i32, %c0_i32_0 : i32, i32
  }
  func.func @transform_1(%arg0: i32) -> i32 {
    %c0_i32 = arith.constant 0 : i32
    %c0_i32_0 = arith.constant 0 : i32
    return %c0_i32 : i32
  }
  func.func @transform_2(%arg0: i32) -> (i32, i32) {
    %c0_i32 = arith.constant 0 : i32
    %c0_i32_0 = arith.constant 0 : i32
    return %arg0, %c0_i32 : i32, i32
  }
  func.func @transform_3(%arg0: i32) -> (i32, i32) {
    %c0_i32 = arith.constant 0 : i32
    %c0_i32_0 = arith.constant 0 : i32
    return %arg0, %c0_i32 : i32, i32
  }
}

</mosaic_0001>

<llo_original>
// kernel: tpu_custom_call.1
$region0: #{tpu_custom_call.1}
  #allocation0 [shape = 'u32[]', space=smem, size = 0x4, offset = 0x4, fixed_abs, tag = 'smem constant byte address 0x4 - core index']
  #allocation1 [shape = 'u32[144,128]{1,0:T(1,128)}', space=vmem, size = 0x12000, scoped, tag = 'internal scratch']
  #allocation2 [shape = 'f32[1,1]{1,0:T(1,128)S(6)}', space=smem, size = 0x200, scoped, tag = 'scoped memory for tpu_custom_call.1']
  #allocation3 [shape = 'f32[1]{0:T(128)S(6)}', space=smem, size = 0x200, scoped, tag = 'scoped memory for tpu_custom_call.1']
  %s0 = inlined_call_operand.<no memory space> [shape: f32[1,1], index: 0, kind: input, shape index: {}]
  %s1 = inlined_call_operand.<no memory space> [shape: f32[1], index: 1, kind: input, shape index: {}]
  %s2 = inlined_call_operand.vmem [shape: f32[1,128], index: 2, kind: input, shape index: {}]
  %s3 = inlined_call_operand.hbm [shape: f32[1,128], index: 3, kind: output, shape index: {}]
  %s4 = sld [smem:[#allocation0]]
  $region22: #{tpu_custom_call.1} parent=0
    _
  %s6 = ssub.s32 1, %s4
  %s7 = scalar_select 0, %s6, %s4
  %8 = sst [smem:[#allocation2]] %s0
  %9 = sst [smem:[#allocation3]] %s1
  $region1: #{tpu_custom_call.1} parent=0
    #allocation4 [shape = 'u8[512]{0}', space=vmem, size = 0x400, scoped, tag = 'output window, operand 0, single buffered']
    #allocation5 [shape = 's32[1]{0}', space=sflag, size = 0x4, scoped, tag = 'scoped memory for tpu_custom_call.1']
    %10 = vsyncpa [#allocation5], 0
    // Predicated region
    $region2: #{tpu_custom_call.1} parent=1 // pred_check
      _
    $region3: #{tpu_custom_call.1} parent=1 // pred_check_branch
      %12 = sbr.rel (0) target = $region5
    $region4: #{tpu_custom_call.1} parent=1 // pred_region
      _
    $region5: #{tpu_custom_call.1} parent=1 // pred_fallthru
      _
    // Predicated region
    $region6: #{tpu_custom_call.1} parent=1 // pred_check
      _
    $region7: #{tpu_custom_call.1} parent=1 // pred_check_branch
      %14 = sbr.rel (0) target = $region9
    $region8: #{tpu_custom_call.1} parent=1 // pred_region
      _
    $region9: #{tpu_custom_call.1} parent=1 // pred_fallthru
      _
    // Predicated region
    $region10: #{tpu_custom_call.1} parent=1 // pred_check
      _
    $region11: #{tpu_custom_call.1} parent=1 // pred_check_branch
      %16 = sbr.rel (0) target = $region13
    $region12: #{tpu_custom_call.1} parent=1 // pred_region
      _
    $region13: #{tpu_custom_call.1} parent=1 // pred_fallthru
      _
    %s17 = sld [smem:[#allocation2]]
    %s18 = sld [smem:[#allocation3]]
    %v19 = vld [vmem:[%s2] sm:$0x1]
    %v20 = vstv %s17
    %v21 = vmul.f32 %v19, %v20
    %v22 = vstv %s18
    %v23 = vadd.f32 %v21, %v22
    %24 = vst [vmem:[#allocation4] sm:$0x1] %v23
    // Predicated region
    $region14: #{tpu_custom_call.1} parent=1 // pred_check
      _
    $region15: #{tpu_custom_call.1} parent=1 // pred_check_branch
      %26 = sbr.rel (0) target = $region17
    $region16: #{tpu_custom_call.1} parent=1 // pred_region
      %s28 = ssub.s32 16, 16
      %29 = vsyncadd [#allocation5], %s28
      %s31 = sshll.u32 [#allocation4], 4
      %s32 = int_to_ptr.vmem [resolvable:$true] %s31
      %34 = dma.vmem_to_hbm [thread:$0]  %s32, 16, %s3, [#allocation5]
    $region17: #{tpu_custom_call.1} parent=1 // pred_fallthru
      _
    // Predicated region
    $region18: #{tpu_custom_call.1} parent=1 // pred_check
      _
    $region19: #{tpu_custom_call.1} parent=1 // pred_check_branch
      %36 = sbr.rel (0) target = $region21
    $region20: #{tpu_custom_call.1} parent=1 // pred_region
      %37 = dma.done [#allocation5], 16
    $region21: #{tpu_custom_call.1} parent=1 // pred_fallthru
      _
    %38 = vsyncpa [#allocation5], 1

</llo_original>
